<compile_context>
chip_gen: v6e
topology: v6e:2x2x1
jax: 0.10.0
libtpu: 0.0.40
codegen_flags: <defaults>
</compile_context>

<pallas_src>
import jax
import jax.numpy as jnp
from jax.experimental import pallas as pl
from jax.experimental.pallas import tpu as pltpu

EPS = 1e-5


# ---------------------------------------------------------------------------
# 1x1 conv (single MXU matmul) + per-channel sum / sumsq stats
# ---------------------------------------------------------------------------
def _conv1x1_stats_kernel(x_ref, w_ref, b_ref, y_ref, stats_ref):
    x = x_ref[0]                                        # (Cin, THW)
    y = jnp.dot(w_ref[...], x,
                preferred_element_type=jnp.float32)     # (Cout, THW) on MXU
    y = y + b_ref[...]                                  # (Cout, 1) broadcast
    y_ref[0] = y.astype(y_ref.dtype)

    s = jnp.sum(y, axis=1, keepdims=True)               # (Cout, 1)
    ss = jnp.sum(y * y, axis=1, keepdims=True)          # (Cout, 1)
    stats_ref[...] = jnp.concatenate([s, ss], axis=1).reshape(1, 1, -1, 2)


def conv1x1_with_stats(x, w, b, thw):
    """x: (N, Cin, HW), w: (Cout, Cin), b: (Cout,)."""
    N, Cin, HW = x.shape
    Cout = w.shape[0]
    nT = HW // thw
    y, stats = pl.pallas_call(
        _conv1x1_stats_kernel,
        out_shape=(jax.ShapeDtypeStruct((N, Cout, HW), jnp.float32),
                   jax.ShapeDtypeStruct((N, nT, Cout, 2), jnp.float32)),
        grid=(N, nT),
        in_specs=[pl.BlockSpec((1, Cin, thw), lambda n, t: (n, 0, t)),
                  pl.BlockSpec((Cout, Cin), lambda n, t: (0, 0)),
                  pl.BlockSpec((Cout, 1), lambda n, t: (0, 0))],
        out_specs=(pl.BlockSpec((1, Cout, thw), lambda n, t: (n, 0, t)),
                   pl.BlockSpec((1, 1, Cout, 2), lambda n, t: (n, t, 0, 0))),
        compiler_params=pltpu.CompilerParams(
            dimension_semantics=("parallel", "parallel")),
    )(x, w, b.reshape(Cout, 1))
    return y, stats


# ---------------------------------------------------------------------------
# Fused BatchNorm (precomputed scale/shift) + ReLU, lane-dense NCHW layout
# ---------------------------------------------------------------------------
def _bn_relu_kernel(y_ref, scale_ref, shift_ref, o_ref):
    y = y_ref[0]                                        # (Cout, THW)
    o_ref[0] = jnp.maximum(y * scale_ref[...] + shift_ref[...],
                           0.0).astype(o_ref.dtype)


def bn_relu(y, scale, shift, thw):
    N, Cout, HW = y.shape
    nT = HW // thw
    return pl.pallas_call(
        _bn_relu_kernel,
        out_shape=jax.ShapeDtypeStruct((N, Cout, HW), jnp.float32),
        grid=(N, nT),
        in_specs=[pl.BlockSpec((1, Cout, thw), lambda n, t: (n, 0, t)),
                  pl.BlockSpec((Cout, 1), lambda n, t: (0, 0)),
                  pl.BlockSpec((Cout, 1), lambda n, t: (0, 0))],
        out_specs=pl.BlockSpec((1, Cout, thw), lambda n, t: (n, 0, t)),
        compiler_params=pltpu.CompilerParams(
            dimension_semantics=("parallel", "parallel")),
    )(y, scale.reshape(Cout, 1), shift.reshape(Cout, 1))


# ---------------------------------------------------------------------------
# co1.forward
# ---------------------------------------------------------------------------
def _pick_hw_tile(hw, cap=2048):
    """Largest 128-multiple divisor of hw <= cap (or hw itself if small)."""
    if hw <= cap:
        return hw
    for t in range(cap - cap % 128, 0, -128):
        if hw % t == 0:
            return t
    return hw


def co1_forward(x_nchw, params):
    N, Cin, H, W = x_nchw.shape
    HW = H * W
    Cout = params["w"].shape[0]
    thw = _pick_hw_tile(HW)

    x = x_nchw.reshape(N, Cin, HW)                      # free metadata reshape

    # Conv 1x1 + batch-stat accumulation
    y, stats = conv1x1_with_stats(x, params["w"], params["b"], thw)

    # BatchNorm2d training-mode forward: biased batch variance
    totals = jnp.sum(stats, axis=(0, 1))                # (Cout, 2)
    count = N * HW
    mean = totals[:, 0] / count
    var = jnp.maximum(totals[:, 1] / count - mean * mean, 0.0)
    scale = params["gamma"] * jax.lax.rsqrt(var + EPS)
    shift = params["beta"] - mean * scale

    # Fused scale/shift + ReLU, written lane-dense in NCHW layout
    out = bn_relu(y, scale, shift, thw)
    return out.reshape(N, Cout, H, W)


def init_params(key, in_channels, out_channels):
    k1, k2 = jax.random.split(key, 2)
    return {
        # conv1x1 weight stored as (Cout, Cin)  (== PyTorch (Cout,Cin,1,1) squeezed)
        "w": 0.1 * jax.random.normal(k1, (out_channels, in_channels),
                                     jnp.float32),
        "b": 0.05 * jax.random.normal(k2, (out_channels,), jnp.float32),
        "gamma": 1.0 + 0.01 * jnp.arange(out_channels, dtype=jnp.float32),
        "beta": 0.01 * jnp.arange(out_channels, dtype=jnp.float32),
    }


if __name__ == "__main__":
    N, Cin, H, W = 2, 4, 16, 16
    Cout = 8

    key = jax.random.PRNGKey(0)
    kx, kp = jax.random.split(key)
    x = jax.random.normal(kx, (N, Cin, H, W), jnp.float32)   # NCHW like PyTorch
    params = init_params(kp, Cin, Cout)

    out = jax.jit(co1_forward)(x, params)
    out = jax.block_until_ready(out)

    assert out.shape == (N, Cout, H, W), out.shape
    assert bool(jnp.all(jnp.isfinite(out)))
    assert bool(jnp.all(out >= 0.0))          # ReLU post-condition
    print("KERNEL_OK")
</pallas_src>

<mosaic_0001>
module attributes {stable_mosaic.version = 11 : i64} {
  func.func @_conv1x1_stats_kernel(%arg0: i32, %arg1: i32, %arg2: memref<1x4x256xf32, #tpu.memory_space<vmem>>, %arg3: memref<8x4xf32, #tpu.memory_space<vmem>>, %arg4: memref<8x1xf32, #tpu.memory_space<vmem>>, %arg5: memref<1x8x256xf32, #tpu.memory_space<vmem>>, %arg6: memref<1x1x8x2xf32, #tpu.memory_space<vmem>>) attributes {dimension_semantics = [#tpu.dimension_semantics<parallel>, #tpu.dimension_semantics<parallel>], iteration_bounds = array<i64: 2, 1>, scalar_prefetch = 0 : i64, scratch_operands = 0 : i64, tpu.core_type = #tpu.core_type<tc>, window_params = [{transform_indices = @transform_0, window_bounds = array<i64: 1, 4, 256>}, {pipeline_mode = #tpu.pipeline_mode<synchronous>, transform_indices = @transform_1, window_bounds = array<i64: 8, 4>}, {pipeline_mode = #tpu.pipeline_mode<synchronous>, transform_indices = @transform_2, window_bounds = array<i64: 8, 1>}, {transform_indices = @transform_3, window_bounds = array<i64: 1, 8, 256>}, {transform_indices = @transform_4, window_bounds = array<i64: 1, 1, 8, 2>}]} {
    %c0 = arith.constant 0 : index
    %c0_0 = arith.constant 0 : index
    %c0_1 = arith.constant 0 : index
    %0 = vector.load %arg2[%c0, %c0_0, %c0_1] : memref<1x4x256xf32, #tpu.memory_space<vmem>>, vector<1x4x256xf32>
    %1 = vector.shape_cast %0 : vector<1x4x256xf32> to vector<4x256xf32>
    %c0_2 = arith.constant 0 : index
    %c0_3 = arith.constant 0 : index
    %2 = vector.load %arg3[%c0_2, %c0_3] : memref<8x4xf32, #tpu.memory_space<vmem>>, vector<8x4xf32>
    %cst = arith.constant dense<0.000000e+00> : vector<8x256xf32>
    %3 = tpu.matmul %2, %1, %cst {dimension_numbers = #tpu.dot_dimension_numbers<[1], [0], [0], [1], [0, 0, 1, 1], [], []>} : vector<8x4xf32>, vector<4x256xf32>, vector<8x256xf32> -> vector<8x256xf32>
    %c0_4 = arith.constant 0 : index
    %c0_5 = arith.constant 0 : index
    %4 = vector.load %arg4[%c0_4, %c0_5] : memref<8x1xf32, #tpu.memory_space<vmem>>, vector<8x1xf32>
    %5 = vector.broadcast %4 : vector<8x1xf32> to vector<8x256xf32>
    %6 = arith.addf %3, %5 : vector<8x256xf32>
    %c0_6 = arith.constant 0 : index
    %c0_7 = arith.constant 0 : index
    %c0_8 = arith.constant 0 : index
    %7 = vector.load %arg5[%c0_6, %c0_7, %c0_8] : memref<1x8x256xf32, #tpu.memory_space<vmem>>, vector<1x8x256xf32>
    %8 = vector.shape_cast %7 : vector<1x8x256xf32> to vector<8x256xf32>
    %9 = vector.shape_cast %6 : vector<8x256xf32> to vector<1x8x256xf32>
    tpu.vector_store %arg5[%c0_6, %c0_7, %c0_8], %9 {strides = array<i32>} : memref<1x8x256xf32, #tpu.memory_space<vmem>>, vector<1x8x256xf32>,
    %cst_9 = arith.constant dense<0.000000e+00> : vector<8xf32>
    %10 = vector.multi_reduction <add>, %6, %cst_9 [1] : vector<8x256xf32> to vector<8xf32>
    %11 = vector.shape_cast %10 : vector<8xf32> to vector<8x1xf32>
    %12 = arith.mulf %6, %6 : vector<8x256xf32>
    %cst_10 = arith.constant dense<0.000000e+00> : vector<8xf32>
    %13 = vector.multi_reduction <add>, %12, %cst_10 [1] : vector<8x256xf32> to vector<8xf32>
    %14 = vector.shape_cast %13 : vector<8xf32> to vector<8x1xf32>
    %15 = tpu.concatenate %11, %14 in 1 : vector<8x1xf32>, vector<8x1xf32> -> vector<8x2xf32>
    %16 = vector.shape_cast %15 : vector<8x2xf32> to vector<1x1x8x2xf32>
    %c0_11 = arith.constant 0 : index
    %c0_12 = arith.constant 0 : index
    %c0_13 = arith.constant 0 : index
    %c0_14 = arith.constant 0 : index
    %17 = vector.load %arg6[%c0_11, %c0_12, %c0_13, %c0_14] : memref<1x1x8x2xf32, #tpu.memory_space<vmem>>, vector<1x1x8x2xf32>
    tpu.vector_store %arg6[%c0_11, %c0_12, %c0_13, %c0_14], %16 {strides = array<i32>} : memref<1x1x8x2xf32, #tpu.memory_space<vmem>>, vector<1x1x8x2xf32>,
    return
  }
  func.func @transform_0(%arg0: i32, %arg1: i32) -> (i32, i32, i32) {
    %c0_i32 = arith.constant 0 : i32
    %c0_i32_0 = arith.constant 0 : i32
    return %arg0, %c0_i32, %arg1 : i32, i32, i32
  }
  func.func @transform_1(%arg0: i32, %arg1: i32) -> (i32, i32) {
    %c0_i32 = arith.constant 0 : i32
    %c0_i32_0 = arith.constant 0 : i32
    %c0_i32_1 = arith.constant 0 : i32
    return %c0_i32, %c0_i32_0 : i32, i32
  }
  func.func @transform_2(%arg0: i32, %arg1: i32) -> (i32, i32) {
    %c0_i32 = arith.constant 0 : i32
    %c0_i32_0 = arith.constant 0 : i32
    %c0_i32_1 = arith.constant 0 : i32
    return %c0_i32, %c0_i32_0 : i32, i32
  }
  func.func @transform_3(%arg0: i32, %arg1: i32) -> (i32, i32, i32) {
    %c0_i32 = arith.constant 0 : i32
    %c0_i32_0 = arith.constant 0 : i32
    return %arg0, %c0_i32, %arg1 : i32, i32, i32
  }
  func.func @transform_4(%arg0: i32, %arg1: i32) -> (i32, i32, i32, i32) {
    %c0_i32 = arith.constant 0 : i32
    %c0_i32_0 = arith.constant 0 : i32
    %c0_i32_1 = arith.constant 0 : i32
    return %arg0, %arg1, %c0_i32, %c0_i32_0 : i32, i32, i32, i32
  }
}

module attributes {stable_mosaic.version = 11 : i64} {
  func.func @_bn_relu_kernel(%arg0: i32, %arg1: i32, %arg2: memref<1x8x256xf32, #tpu.memory_space<vmem>>, %arg3: memref<8x1xf32, #tpu.memory_space<vmem>>, %arg4: memref<8x1xf32, #tpu.memory_space<vmem>>, %arg5: memref<1x8x256xf32, #tpu.memory_space<vmem>>) attributes {dimension_semantics = [#tpu.dimension_semantics<parallel>, #tpu.dimension_semantics<parallel>], iteration_bounds = array<i64: 2, 1>, scalar_prefetch = 0 : i64, scratch_operands = 0 : i64, tpu.core_type = #tpu.core_type<tc>, window_params = [{transform_indices = @transform_0, window_bounds = array<i64: 1, 8, 256>}, {pipeline_mode = #tpu.pipeline_mode<synchronous>, transform_indices = @transform_1, window_bounds = array<i64: 8, 1>}, {pipeline_mode = #tpu.pipeline_mode<synchronous>, transform_indices = @transform_2, window_bounds = array<i64: 8, 1>}, {transform_indices = @transform_3, window_bounds = array<i64: 1, 8, 256>}]} {
    %c0 = arith.constant 0 : index
    %c0_0 = arith.constant 0 : index
    %c0_1 = arith.constant 0 : index
    %0 = vector.load %arg2[%c0, %c0_0, %c0_1] : memref<1x8x256xf32, #tpu.memory_space<vmem>>, vector<1x8x256xf32>
    %1 = vector.shape_cast %0 : vector<1x8x256xf32> to vector<8x256xf32>
    %c0_2 = arith.constant 0 : index
    %c0_3 = arith.constant 0 : index
    %2 = vector.load %arg3[%c0_2, %c0_3] : memref<8x1xf32, #tpu.memory_space<vmem>>, vector<8x1xf32>
    %3 = vector.broadcast %2 : vector<8x1xf32> to vector<8x256xf32>
    %4 = arith.mulf %1, %3 : vector<8x256xf32>
    %c0_4 = arith.constant 0 : index
    %c0_5 = arith.constant 0 : index
    %5 = vector.load %arg4[%c0_4, %c0_5] : memref<8x1xf32, #tpu.memory_space<vmem>>, vector<8x1xf32>
    %6 = vector.broadcast %5 : vector<8x1xf32> to vector<8x256xf32>
    %7 = arith.addf %4, %6 : vector<8x256xf32>
    %cst = arith.constant 0.000000e+00 : f32
    %8 = vector.broadcast %cst : f32 to vector<8x256xf32>
    %9 = arith.maximumf %7, %8 : vector<8x256xf32>
    %c0_6 = arith.constant 0 : index
    %c0_7 = arith.constant 0 : index
    %c0_8 = arith.constant 0 : index
    %10 = vector.load %arg5[%c0_6, %c0_7, %c0_8] : memref<1x8x256xf32, #tpu.memory_space<vmem>>, vector<1x8x256xf32>
    %11 = vector.shape_cast %10 : vector<1x8x256xf32> to vector<8x256xf32>
    %12 = vector.shape_cast %9 : vector<8x256xf32> to vector<1x8x256xf32>
    tpu.vector_store %arg5[%c0_6, %c0_7, %c0_8], %12 {strides = array<i32>} : memref<1x8x256xf32, #tpu.memory_space<vmem>>, vector<1x8x256xf32>,
    return
  }
  func.func @transform_0(%arg0: i32, %arg1: i32) -> (i32, i32, i32) {
    %c0_i32 = arith.constant 0 : i32
    %c0_i32_0 = arith.constant 0 : i32
    return %arg0, %c0_i32, %arg1 : i32, i32, i32
  }
  func.func @transform_1(%arg0: i32, %arg1: i32) -> (i32, i32) {
    %c0_i32 = arith.constant 0 : i32
    %c0_i32_0 = arith.constant 0 : i32
    %c0_i32_1 = arith.constant 0 : i32
    return %c0_i32, %c0_i32_0 : i32, i32
  }
  func.func @transform_2(%arg0: i32, %arg1: i32) -> (i32, i32) {
    %c0_i32 = arith.constant 0 : i32
    %c0_i32_0 = arith.constant 0 : i32
    %c0_i32_1 = arith.constant 0 : i32
    return %c0_i32, %c0_i32_0 : i32, i32
  }
  func.func @transform_3(%arg0: i32, %arg1: i32) -> (i32, i32, i32) {
    %c0_i32 = arith.constant 0 : i32
    %c0_i32_0 = arith.constant 0 : i32
    return %arg0, %c0_i32, %arg1 : i32, i32, i32
  }
}

</mosaic_0001>

<llo_original>
// kernel: co1_forward.2
$region0: #{co1_forward.2}
  #allocation0 [shape = 'u32[]', space=smem, size = 0x4, offset = 0x4, fixed_abs, tag = 'smem constant byte address 0x4 - core index']
  #allocation1 [shape = 'u32[144,128]{1,0:T(1,128)}', space=vmem, size = 0x12000, scoped, tag = 'internal scratch']
  %s0 = inlined_call_operand.vmem [shape: f32[2,4,256], index: 0, kind: input, shape index: {}]
  %s1 = inlined_call_operand.vmem [shape: f32[8,4], index: 1, kind: input, shape index: {}]
  %s2 = inlined_call_operand.vmem [shape: f32[8,1], index: 2, kind: input, shape index: {}]
  %s3 = inlined_call_operand.vmem [shape: f32[2,8,256], index: 3, kind: output, shape index: {0}]
  %s4 = inlined_call_operand.vmem [shape: f32[2,1,8,2], index: 4, kind: output, shape index: {1}]
  %5 = xla_tuple %s3, %s4
  %s6 = sld [smem:[#allocation0]]
  $region53: #{co1_forward.2} parent=0
    _
  %s8 = ssub.s32 1, %s6
  %s9 = scalar_select 0, %s8, %s6
  loop: start=0, step=1, limit=4
  $region2: #{co1_forward.2} parent=0 // loop_pre_header
    _
  $region3: #{co1_forward.2} parent=0 // loop_header
    %s11 = sphi 0, %s15
    %p12 = scmp.ge.s32.totalorder %s11, 4
    %s18 = sphi 0, %s30
    %s19 = sphi 0, %s26
    %s20 = sphi 0, %s18
    %s21 = sphi 0, %s19
    %s22 = sphi 0, %s20
    %s23 = sphi 0, %s21
    %s35 = sphi 0, %s37
    %s38 = sphi 0, %s35
    %s39 = sphi 0, %s38
    %s55 = sphi 0, %s39
    %s59 = sphi 0, %s59
    %s61 = sphi 0, %s59
    %s62 = sphi 0, %s61
    %s76 = sphi 0, %s62
    %s80 = sphi 0, %s80
    %s82 = sphi 0, %s80
    %s83 = sphi 0, %s82
    %s97 = sphi 0, %s83
    %s105 = sphi 0, %s107
    %s108 = sphi 0, %s105
    %s109 = sphi 0, %s108
    %s125 = sphi 0, %s109
    %s133 = sphi 0, %s135
    %s136 = sphi 0, %s133
    %s137 = sphi 0, %s136
    %s153 = sphi 0, %s137
  $region4: #{co1_forward.2} parent=0 // loop_header_branch
    %14 = sbr.rel (%p12) target = $region8
  $region5: #{co1_forward.2} parent=0 // loop_body
    %s16 = ssub.s32 %s11, 1
    %s17 = ssub.s32 %s11, 2
    %s24 = sadd.s32 1, %s19
    %p25 = scmp.ge.s32.totalorder %s24, 1
    %s26 = scalar_select %p25, 0, %s24
    %s27 = sadd.s32 1, %s18
    %s28 = scalar_select %p25, %s27, %s18
    %p29 = scmp.ge.s32.totalorder %s28, 2
    %s30 = scalar_select %p29, 0, %s28
    %s31 = ssub.s32 %s18, %s30
    %s32 = ssub.s32 %s19, %s26
    %s33 = sor.u32 %s31, %s32
    %p34 = scmp.eq.s32.totalorder %s33, 0
    %s36 = sadd.s32 %s35, 1
    %s37 = scalar_select %p34, %s35, %s36
    %p40 = pneg %p34
    %p41 = scmp.eq.s32.totalorder %s11, 1
    %p42 = por %p40, %p41
    %p43 = scmp.ne.s32.totalorder %s35, %s38
    %p44 = scmp.eq.s32.totalorder %s11, 0
    %p45 = por %p43, %p44
    %p46 = scmp.ne.s32.totalorder %s35, %s38
    %p47 = scmp.eq.s32.totalorder %s16, 1
    %p48 = por %p46, %p47
    %p49 = scmp.ne.s32.totalorder %s38, %s39
    %p50 = scmp.eq.s32.totalorder %s16, 0
    %p51 = por %p49, %p50
    %p52 = scmp.ne.s32.totalorder %s38, %s39
    %p53 = scmp.eq.s32.totalorder %s17, 1
    %p54 = por %p52, %p53
    %p56 = scmp.ne.s32.totalorder %s39, %s55
    %p57 = scmp.eq.s32.totalorder %s17, 0
    %p58 = por %p56, %p57
    %s60 = sadd.s32 %s59, 1
    %p63 = scmp.eq.s32.totalorder %s11, 1
    %p64 = scmp.ne.s32.totalorder %s59, %s61
    %p65 = scmp.eq.s32.totalorder %s11, 0
    %p66 = por %p64, %p65
    %p67 = scmp.ne.s32.totalorder %s59, %s61
    %p68 = scmp.eq.s32.totalorder %s16, 1
    %p69 = por %p67, %p68
    %p70 = scmp.ne.s32.totalorder %s61, %s62
    %p71 = scmp.eq.s32.totalorder %s16, 0
    %p72 = por %p70, %p71
    %p73 = scmp.ne.s32.totalorder %s61, %s62
    %p74 = scmp.eq.s32.totalorder %s17, 1
    %p75 = por %p73, %p74
    %p77 = scmp.ne.s32.totalorder %s62, %s76
    %p78 = scmp.eq.s32.totalorder %s17, 0
    %p79 = por %p77, %p78
    %s81 = sadd.s32 %s80, 1
    %p84 = scmp.eq.s32.totalorder %s11, 1
    %p85 = scmp.ne.s32.totalorder %s80, %s82
    %p86 = scmp.eq.s32.totalorder %s11, 0
    %p87 = por %p85, %p86
    %p88 = scmp.ne.s32.totalorder %s80, %s82
    %p89 = scmp.eq.s32.totalorder %s16, 1
    %p90 = por %p88, %p89
    %p91 = scmp.ne.s32.totalorder %s82, %s83
    %p92 = scmp.eq.s32.totalorder %s16, 0
    %p93 = por %p91, %p92
    %p94 = scmp.ne.s32.totalorder %s82, %s83
    %p95 = scmp.eq.s32.totalorder %s17, 1
    %p96 = por %p94, %p95
    %p98 = scmp.ne.s32.totalorder %s83, %s97
    %p99 = scmp.eq.s32.totalorder %s17, 0
    %p100 = por %p98, %p99
    %s101 = ssub.s32 %s18, %s30
    %s102 = ssub.s32 %s19, %s26
    %s103 = sor.u32 %s101, %s102
    %p104 = scmp.eq.s32.totalorder %s103, 0
    %s106 = sadd.s32 %s105, 1
    %s107 = scalar_select %p104, %s105, %s106
    %p110 = pneg %p104
    %p111 = scmp.eq.s32.totalorder %s11, 1
    %p112 = por %p110, %p111
    %p113 = scmp.ne.s32.totalorder %s105, %s108
    %p114 = scmp.eq.s32.totalorder %s11, 0
    %p115 = por %p113, %p114
    %p116 = scmp.ne.s32.totalorder %s105, %s108
    %p117 = scmp.eq.s32.totalorder %s16, 1
    %p118 = por %p116, %p117
    %p119 = scmp.ne.s32.totalorder %s108, %s109
    %p120 = scmp.eq.s32.totalorder %s16, 0
    %p121 = por %p119, %p120
    %p122 = scmp.ne.s32.totalorder %s108, %s109
    %p123 = scmp.eq.s32.totalorder %s17, 1
    %p124 = por %p122, %p123
    %p126 = scmp.ne.s32.totalorder %s109, %s125
    %p127 = scmp.eq.s32.totalorder %s17, 0
    %p128 = por %p126, %p127
    %s129 = ssub.s32 %s18, %s30
    %s130 = ssub.s32 %s19, %s26
    %s131 = sor.u32 %s129, %s130
    %p132 = scmp.eq.s32.totalorder %s131, 0
    %s134 = sadd.s32 %s133, 1
    %s135 = scalar_select %p132, %s133, %s134
    %p138 = pneg %p132
    %p139 = scmp.eq.s32.totalorder %s11, 1
    %p140 = por %p138, %p139
    %p141 = scmp.ne.s32.totalorder %s133, %s136
    %p142 = scmp.eq.s32.totalorder %s11, 0
    %p143 = por %p141, %p142
    %p144 = scmp.ne.s32.totalorder %s133, %s136
    %p145 = scmp.eq.s32.totalorder %s16, 1
    %p146 = por %p144, %p145
    %p147 = scmp.ne.s32.totalorder %s136, %s137
    %p148 = scmp.eq.s32.totalorder %s16, 0
    %p149 = por %p147, %p148
    %p150 = scmp.ne.s32.totalorder %s136, %s137
    %p151 = scmp.eq.s32.totalorder %s17, 1
    %p152 = por %p150, %p151
    %p154 = scmp.ne.s32.totalorder %s137, %s153
    %p155 = scmp.eq.s32.totalorder %s17, 0
    %p156 = por %p154, %p155
    %p157 = scmp.le.s32.totalorder 1, %s11
    %p158 = scmp.lt.s32.totalorder %s11, 3
    %p159 = pnand %p157, %p158
    %p160 = pneg %p159
    // Predicated region
    $region9: #{co1_forward.2} parent=5 // pred_check
      _
    $region10: #{co1_forward.2} parent=5 // pred_check_branch
      %162 = sbr.rel (%p159) target = $region12
    $region11: #{co1_forward.2} parent=5 // pred_region
      %s163 = ssub.s32 %s11, 1
      // Predicated region
      $region13: #{co1_forward.2} parent=11 // pred_check
        %p164 = pneg %p72
      $region14: #{co1_forward.2} parent=11 // pred_check_branch
        %166 = sbr.rel (%p164) target = $region16
      $region15: #{co1_forward.2} parent=11 // pred_region
        _
      $region16: #{co1_forward.2} parent=11 // pred_fallthru
        _
      // Predicated region
      $region17: #{co1_forward.2} parent=11 // pred_check
        %p167 = pneg %p93
      $region18: #{co1_forward.2} parent=11 // pred_check_branch
        %169 = sbr.rel (%p167) target = $region20
      $region19: #{co1_forward.2} parent=11 // pred_region
        _
      $region20: #{co1_forward.2} parent=11 // pred_fallthru
        _
    $region12: #{co1_forward.2} parent=5 // pred_fallthru
      _
    %p170 = scmp.lt.s32.totalorder %s11, 2
    // Predicated region
    $region21: #{co1_forward.2} parent=5 // pred_check
      %p171 = pneg %p170
    $region22: #{co1_forward.2} parent=5 // pred_check_branch
      %173 = sbr.rel (%p171) target = $region24
    $region23: #{co1_forward.2} parent=5 // pred_region
      // Predicated region
      $region25: #{co1_forward.2} parent=23 // pred_check
        %p174 = pneg %p45
      $region26: #{co1_forward.2} parent=23 // pred_check_branch
        %176 = sbr.rel (%p174) target = $region28
      $region27: #{co1_forward.2} parent=23 // pred_region
        %s177 = smul.u32 2, %s19
        %p178 = scmp.lt.s32.totalorder %s18, 1
        %s179 = scalar_select %p178, %s18, 1
        %p180 = scmp.lt.s32.totalorder %s177, 1
        %s181 = scalar_select %p180, %s177, 1
        %s182 = smul.addr %s179, 2
        %s183 = sadd.s32 %s181, %s182
        %s184 = smul.addr %s183, 4
        %s185 = scalar_lea.vmem %s0, %s184
        %s186 = smul.u32 2, %s19
      $region28: #{co1_forward.2} parent=23 // pred_fallthru
        _
    $region24: #{co1_forward.2} parent=5 // pred_fallthru
      _
    %p187 = scmp.le.s32.totalorder 1, %s11
    %p188 = scmp.lt.s32.totalorder %s11, 3
    %p189 = pnand %p187, %p188
    %p190 = pneg %p189
    // Predicated region
    $region29: #{co1_forward.2} parent=5 // pred_check
      _
    $region30: #{co1_forward.2} parent=5 // pred_check_branch
      %192 = sbr.rel (%p189) target = $region32
    $region31: #{co1_forward.2} parent=5 // pred_region
      %s193 = ssub.s32 %s11, 1
      %s194 = smul.u32 2, %s21
      %p195 = scmp.lt.s32.totalorder %s20, 1
      %s196 = scalar_select %p195, %s20, 1
      %p197 = scmp.lt.s32.totalorder %s194, 1
      %s198 = scalar_select %p197, %s194, 1
      %s199 = smul.addr %s196, 2
      %s200 = sadd.s32 %s198, %s199
      %s201 = smul.addr %s200, 4
      %s202 = scalar_lea.vmem %s0, %s201
      %p203 = pneg %p51
      %p204 = pneg %p48
      %p205 = pneg %p72
      %p206 = pneg %p69
      %p207 = pneg %p93
      %p208 = pneg %p90
      %p209 = pneg %p121
      %p210 = pneg %p118
      %s211 = smul.u32 2, %s21
      %p212 = scmp.lt.s32.totalorder %s20, 1
      %s213 = scalar_select %p212, %s20, 1
      %p214 = scmp.lt.s32.totalorder %s211, 1
      %s215 = scalar_select %p214, %s211, 1
      %s216 = smul.addr %s213, 2
      %s217 = sadd.s32 %s215, %s216
      %s218 = smul.addr %s217, 8
      %s219 = scalar_lea.vmem %s3, %s218
      %p220 = pneg %p149
      %p221 = pneg %p146
      %p222 = scmp.lt.s32.totalorder %s20, 1
      %s223 = scalar_select %p222, %s20, 1
      %p224 = scmp.lt.s32.totalorder %s21, 0
      %s225 = scalar_select %p224, %s21, 0
      %s226 = sadd.s32 %s225, %s223
      %s227 = smul.addr %s226, 8
      %s228 = scalar_lea.vmem %s4, %s227
      %s229 = smul.u32 2, %s21
      %p230 = scmp.lt.s32.totalorder %s20, 1
      %s231 = scalar_select %p230, %s20, 1
      %p232 = scmp.lt.s32.totalorder %s229, 1
      %s233 = scalar_select %p232, %s229, 1
      %s234 = smul.addr %s231, 2
      %s235 = sadd.s32 %s233, %s234
      %s236 = smul.addr %s235, 4
      %s237 = scalar_lea.vmem %s0, %s236
      %s238 = smul.u32 2, %s21
      %s239 = smul.u32 2, %s21
      %p240 = scmp.lt.s32.totalorder %s20, 1
      %s241 = scalar_select %p240, %s20, 1
      %p242 = scmp.lt.s32.totalorder %s239, 1
      %s243 = scalar_select %p242, %s239, 1
      %s244 = smul.addr %s241, 2
      %s245 = sadd.s32 %s243, %s244
      %s246 = smul.addr %s245, 8
      %s247 = scalar_lea.vmem %s3, %s246
      %s248 = smul.u32 2, %s21
      %p249 = scmp.lt.s32.totalorder %s20, 1
      %s250 = scalar_select %p249, %s20, 1
      %p251 = scmp.lt.s32.totalorder %s21, 0
      %s252 = scalar_select %p251, %s21, 0
      %s253 = sadd.s32 %s252, %s250
      %s254 = smul.addr %s253, 8
      %s255 = scalar_lea.vmem %s4, %s254
      %v256 = vld [vmem:[%s237] sm:$0xff]
      %v257 = vld [vmem:[%s1] sm:$0xff]
      %v258 = vld [vmem:[%s2] sm:$0xff]
      %260 = vset.pattern.permute.xlu0 0
      %261 = vperm.xlu0 %260, %v258
      %v262 = vpop.permute.xlu0 %261
      %v265 = vcombine.high %v256, %v256
      %vm266 = vcmask 31744
      %v268 = vsel %vm266, %v257, 0
      %vm270 = vcmask 1043456
      %v271 = vsel %vm270, %v256, 0
      %v273 = vsel %vm270, %v265, 0
      %275 = vmatprep.subr.mxu0 0.0
      %276 = vmatpush1.msra.mxu0 0.0
      %277 = vmatprep.subr.mxu0 0.0
      %278 = vmatpush1.msra.mxu0 0.0
      %279 = vmatprep.subr.mxu0 0.0
      %280 = vmatpush1.msra.mxu0 0.0
      %281 = vmatprep.subr.mxu0 0.0
      %282 = vmatpush1.msra.mxu0 0.0
      %283 = vmatprep.subr.mxu0 0.0
      %284 = vmatpush1.msra.mxu0 0.0
      %285 = vmatprep.subr.mxu0 0.0
      %286 = vmatpush1.msra.mxu0 0.0
      %287 = vmatprep.subr.mxu0 0.0
      %288 = vmatpush1.msra.mxu0 0.0
      %289 = vmatprep.subr.mxu0 0.0
      %290 = vmatpush1.msra.mxu0 0.0
      %291 = vmatprep.subr.mxu0 0.0
      %292 = vmatpush1.msra.mxu0 0.0
      %293 = vmatprep.subr.mxu0 0.0
      %294 = vmatpush1.msra.mxu0 0.0
      %295 = vmatprep.subr.mxu0 0.0
      %296 = vmatpush1.msra.mxu0 0.0
      %297 = vmatprep.subr.mxu0 0.0
      %298 = vmatpush1.msra.mxu0 0.0
      %299 = vmatprep.subr.mxu0 0.0
      %300 = vmatpush1.msra.mxu0 0.0
      %301 = vmatprep.subr.mxu0 0.0
      %302 = vmatpush1.msra.mxu0 0.0
      %303 = vmatprep.subr.mxu0 0.0
      %304 = vmatpush1.msra.mxu0 0.0
      %305 = vmatprep.subr.mxu0 %v273
      %306 = vmatpush1.msra.mxu0 %v271
      %307 = vmatprep.subr.mxu0 0.0
      %308 = vmatpush2.msra.mxu0 0.0
      %309 = vmatprep.subr.mxu0 0.0
      %310 = vmatpush2.msra.mxu0 0.0
      %311 = vmatprep.subr.mxu0 0.0
      %312 = vmatpush2.msra.mxu0 0.0
      %313 = vmatprep.subr.mxu0 0.0
      %314 = vmatpush2.msra.mxu0 0.0
      %315 = vmatprep.subr.mxu0 0.0
      %316 = vmatpush2.msra.mxu0 0.0
      %317 = vmatprep.subr.mxu0 0.0
      %318 = vmatpush2.msra.mxu0 0.0
      %319 = vmatprep.subr.mxu0 0.0
      %320 = vmatpush2.msra.mxu0 0.0
      %321 = vmatprep.subr.mxu0 0.0
      %322 = vmatpush2.msra.mxu0 0.0
      %323 = vmatprep.subr.mxu0 0.0
      %324 = vmatpush2.msra.mxu0 0.0
      %325 = vmatprep.subr.mxu0 0.0
      %326 = vmatpush2.msra.mxu0 0.0
      %327 = vmatprep.subr.mxu0 0.0
      %328 = vmatpush2.msra.mxu0 0.0
      %329 = vmatprep.subr.mxu0 0.0
      %330 = vmatpush2.msra.mxu0 0.0
      %331 = vmatprep.subr.mxu0 0.0
      %332 = vmatpush2.msra.mxu0 0.0
      %333 = vmatprep.subr.mxu0 0.0
      %334 = vmatpush2.msra.mxu0 0.0
      %335 = vmatprep.subr.mxu0 0.0
      %336 = vmatpush2.msra.mxu0 0.0
      %337 = vmatprep.subr.mxu0 0.0
      %338 = vmatpush2.msra.mxu0 0.0
      %339 = vmatprep.mubr.f32.mxu0 0.0
      %340 = vmatmul.mubr.f32.gmra.mxu0 %v268
      %v341 = vpop.f32.mrf.mxu0
      %v342 = vadd.f32 %v262, %v341
      %v343 = vpop.f32.mrf.mxu0
      %v344 = vadd.f32 %v262, %v343
      %345 = vdwg.mxu0
      %346 = vst [vmem:[%s247] sm:$0xff] %v342
      %347 = vst [vmem:[%s247 + $0x8] sm:$0xff] %v344
      %v348 = vadd.f32 %v342, %v344
      %349 = vadd.xlane.f32.xlu0 %v348
      %v350 = vpop.xlane.xlu0 %349
      %v351 = vmul.f32 %v342, %v342
      %v352 = vmul.f32 %v344, %v344
      %v353 = vadd.f32 %v351, %v352
      %354 = vadd.xlane.f32.xlu0 %v353
      %v355 = vpop.xlane.xlu0 %354
      %vm356 = vcmask 7168
      %v357 = vsel %vm356, %v350, %v355
      %vm358 = vcmask 15360
      %359 = vst.msk [vmem:[%s255] sm:$0xff] %vm358, %v357
      %s360 = smul.u32 2, %s21
      %p361 = scmp.lt.s32.totalorder %s20, 1
      %s362 = scalar_select %p361, %s20, 1
      %p363 = scmp.lt.s32.totalorder %s360, 1
      %s364 = scalar_select %p363, %s360, 1
      %s365 = smul.addr %s362, 2
      %s366 = sadd.s32 %s364, %s365
      %s367 = smul.addr %s366, 8
      %s368 = scalar_lea.vmem %s3, %s367
      %p369 = scmp.lt.s32.totalorder %s20, 1
      %s370 = scalar_select %p369, %s20, 1
      %p371 = scmp.lt.s32.totalorder %s21, 0
      %s372 = scalar_select %p371, %s21, 0
      %s373 = sadd.s32 %s372, %s370
      %s374 = smul.addr %s373, 8
      %s375 = scalar_lea.vmem %s4, %s374
      // Predicated region
      $region33: #{co1_forward.2} parent=31 // pred_check
        %p376 = pneg %p118
      $region34: #{co1_forward.2} parent=31 // pred_check_branch
        %378 = sbr.rel (%p376) target = $region36
      $region35: #{co1_forward.2} parent=31 // pred_region
        %s379 = smul.u32 2, %s21
      $region36: #{co1_forward.2} parent=31 // pred_fallthru
        _
      // Predicated region
      $region37: #{co1_forward.2} parent=31 // pred_check
        %p380 = pneg %p146
      $region38: #{co1_forward.2} parent=31 // pred_check_branch
        %382 = sbr.rel (%p380) target = $region40
      $region39: #{co1_forward.2} parent=31 // pred_region
        _
      $region40: #{co1_forward.2} parent=31 // pred_fallthru
        _
    $region32: #{co1_forward.2} parent=5 // pred_fallthru
      _
    %p383 = scmp.le.s32.totalorder 2, %s11
    // Predicated region
    $region41: #{co1_forward.2} parent=5 // pred_check
      %p384 = pneg %p383
    $region42: #{co1_forward.2} parent=5 // pred_check_branch
      %386 = sbr.rel (%p384) target = $region44
    $region43: #{co1_forward.2} parent=5 // pred_region
      %s387 = ssub.s32 %s11, 2
      // Predicated region
      $region45: #{co1_forward.2} parent=43 // pred_check
        %p388 = pneg %p124
      $region46: #{co1_forward.2} parent=43 // pred_check_branch
        %390 = sbr.rel (%p388) target = $region48
      $region47: #{co1_forward.2} parent=43 // pred_region
        %s391 = smul.u32 2, %s23
        %p392 = scmp.lt.s32.totalorder %s22, 1
        %s393 = scalar_select %p392, %s22, 1
        %p394 = scmp.lt.s32.totalorder %s391, 1
        %s395 = scalar_select %p394, %s391, 1
        %s396 = smul.addr %s393, 2
        %s397 = sadd.s32 %s395, %s396
        %s398 = smul.addr %s397, 8
        %s399 = scalar_lea.vmem %s3, %s398
      $region48: #{co1_forward.2} parent=43 // pred_fallthru
        _
      // Predicated region
      $region49: #{co1_forward.2} parent=43 // pred_check
        %p400 = pneg %p152
      $region50: #{co1_forward.2} parent=43 // pred_check_branch
        %402 = sbr.rel (%p400) target = $region52
      $region51: #{co1_forward.2} parent=43 // pred_region
        %p403 = scmp.lt.s32.totalorder %s22, 1
        %s404 = scalar_select %p403, %s22, 1
        %p405 = scmp.lt.s32.totalorder %s23, 0
        %s406 = scalar_select %p405, %s23, 0
        %s407 = sadd.s32 %s406, %s404
        %s408 = smul.addr %s407, 8
        %s409 = scalar_lea.vmem %s4, %s408
      $region52: #{co1_forward.2} parent=43 // pred_fallthru
        _
    $region44: #{co1_forward.2} parent=5 // pred_fallthru
      _
  $region6: #{co1_forward.2} parent=0 // loop_footer
    %s15 = sadd.s32 1, %s11
  $region7: #{co1_forward.2} parent=0 // loop_footer_branch
    %10 = sbr.rel target = $region3
  $region8: #{co1_forward.2} parent=0 // loop_exit
    _

// kernel: co1_forward.3
$region0: #{co1_forward.3}
  #allocation0 [shape = 'u32[]', space=smem, size = 0x4, offset = 0x4, fixed_abs, tag = 'smem constant byte address 0x4 - core index']
  #allocation1 [shape = 'u32[144,128]{1,0:T(1,128)}', space=vmem, size = 0x12000, scoped, tag = 'internal scratch']
  %s0 = inlined_call_operand.vmem [shape: f32[2,8,256], index: 0, kind: input, shape index: {}]
  %s1 = inlined_call_operand.vmem [shape: f32[8,1], index: 1, kind: input, shape index: {}]
  %s2 = inlined_call_operand.vmem [shape: f32[8,1], index: 2, kind: input, shape index: {}]
  %s3 = inlined_call_operand.vmem [shape: f32[2,8,256], index: 3, kind: output, shape index: {}]
  %s4 = sld [smem:[#allocation0]]
  $region45: #{co1_forward.3} parent=0
    _
  %s6 = ssub.s32 1, %s4
  %s7 = scalar_select 0, %s6, %s4
  loop: start=0, step=1, limit=4
  $region2: #{co1_forward.3} parent=0 // loop_pre_header
    _
  $region3: #{co1_forward.3} parent=0 // loop_header
    %s9 = sphi 0, %s13
    %p10 = scmp.ge.s32.totalorder %s9, 4
    %s16 = sphi 0, %s28
    %s17 = sphi 0, %s24
    %s18 = sphi 0, %s16
    %s19 = sphi 0, %s17
    %s20 = sphi 0, %s18
    %s21 = sphi 0, %s19
    %s33 = sphi 0, %s35
    %s36 = sphi 0, %s33
    %s37 = sphi 0, %s36
    %s53 = sphi 0, %s37
    %s57 = sphi 0, %s57
    %s59 = sphi 0, %s57
    %s60 = sphi 0, %s59
    %s74 = sphi 0, %s60
    %s78 = sphi 0, %s78
    %s80 = sphi 0, %s78
    %s81 = sphi 0, %s80
    %s95 = sphi 0, %s81
    %s103 = sphi 0, %s105
    %s106 = sphi 0, %s103
    %s107 = sphi 0, %s106
    %s123 = sphi 0, %s107
  $region4: #{co1_forward.3} parent=0 // loop_header_branch
    %12 = sbr.rel (%p10) target = $region8
  $region5: #{co1_forward.3} parent=0 // loop_body
    %s14 = ssub.s32 %s9, 1
    %s15 = ssub.s32 %s9, 2
    %s22 = sadd.s32 1, %s17
    %p23 = scmp.ge.s32.totalorder %s22, 1
    %s24 = scalar_select %p23, 0, %s22
    %s25 = sadd.s32 1, %s16
    %s26 = scalar_select %p23, %s25, %s16
    %p27 = scmp.ge.s32.totalorder %s26, 2
    %s28 = scalar_select %p27, 0, %s26
    %s29 = ssub.s32 %s16, %s28
    %s30 = ssub.s32 %s17, %s24
    %s31 = sor.u32 %s29, %s30
    %p32 = scmp.eq.s32.totalorder %s31, 0
    %s34 = sadd.s32 %s33, 1
    %s35 = scalar_select %p32, %s33, %s34
    %p38 = pneg %p32
    %p39 = scmp.eq.s32.totalorder %s9, 1
    %p40 = por %p38, %p39
    %p41 = scmp.ne.s32.totalorder %s33, %s36
    %p42 = scmp.eq.s32.totalorder %s9, 0
    %p43 = por %p41, %p42
    %p44 = scmp.ne.s32.totalorder %s33, %s36
    %p45 = scmp.eq.s32.totalorder %s14, 1
    %p46 = por %p44, %p45
    %p47 = scmp.ne.s32.totalorder %s36, %s37
    %p48 = scmp.eq.s32.totalorder %s14, 0
    %p49 = por %p47, %p48
    %p50 = scmp.ne.s32.totalorder %s36, %s37
    %p51 = scmp.eq.s32.totalorder %s15, 1
    %p52 = por %p50, %p51
    %p54 = scmp.ne.s32.totalorder %s37, %s53
    %p55 = scmp.eq.s32.totalorder %s15, 0
    %p56 = por %p54, %p55
    %s58 = sadd.s32 %s57, 1
    %p61 = scmp.eq.s32.totalorder %s9, 1
    %p62 = scmp.ne.s32.totalorder %s57, %s59
    %p63 = scmp.eq.s32.totalorder %s9, 0
    %p64 = por %p62, %p63
    %p65 = scmp.ne.s32.totalorder %s57, %s59
    %p66 = scmp.eq.s32.totalorder %s14, 1
    %p67 = por %p65, %p66
    %p68 = scmp.ne.s32.totalorder %s59, %s60
    %p69 = scmp.eq.s32.totalorder %s14, 0
    %p70 = por %p68, %p69
    %p71 = scmp.ne.s32.totalorder %s59, %s60
    %p72 = scmp.eq.s32.totalorder %s15, 1
    %p73 = por %p71, %p72
    %p75 = scmp.ne.s32.totalorder %s60, %s74
    %p76 = scmp.eq.s32.totalorder %s15, 0
    %p77 = por %p75, %p76
    %s79 = sadd.s32 %s78, 1
    %p82 = scmp.eq.s32.totalorder %s9, 1
    %p83 = scmp.ne.s32.totalorder %s78, %s80
    %p84 = scmp.eq.s32.totalorder %s9, 0
    %p85 = por %p83, %p84
    %p86 = scmp.ne.s32.totalorder %s78, %s80
    %p87 = scmp.eq.s32.totalorder %s14, 1
    %p88 = por %p86, %p87
    %p89 = scmp.ne.s32.totalorder %s80, %s81
    %p90 = scmp.eq.s32.totalorder %s14, 0
    %p91 = por %p89, %p90
    %p92 = scmp.ne.s32.totalorder %s80, %s81
    %p93 = scmp.eq.s32.totalorder %s15, 1
    %p94 = por %p92, %p93
    %p96 = scmp.ne.s32.totalorder %s81, %s95
    %p97 = scmp.eq.s32.totalorder %s15, 0
    %p98 = por %p96, %p97
    %s99 = ssub.s32 %s16, %s28
    %s100 = ssub.s32 %s17, %s24
    %s101 = sor.u32 %s99, %s100
    %p102 = scmp.eq.s32.totalorder %s101, 0
    %s104 = sadd.s32 %s103, 1
    %s105 = scalar_select %p102, %s103, %s104
    %p108 = pneg %p102
    %p109 = scmp.eq.s32.totalorder %s9, 1
    %p110 = por %p108, %p109
    %p111 = scmp.ne.s32.totalorder %s103, %s106
    %p112 = scmp.eq.s32.totalorder %s9, 0
    %p113 = por %p111, %p112
    %p114 = scmp.ne.s32.totalorder %s103, %s106
    %p115 = scmp.eq.s32.totalorder %s14, 1
    %p116 = por %p114, %p115
    %p117 = scmp.ne.s32.totalorder %s106, %s107
    %p118 = scmp.eq.s32.totalorder %s14, 0
    %p119 = por %p117, %p118
    %p120 = scmp.ne.s32.totalorder %s106, %s107
    %p121 = scmp.eq.s32.totalorder %s15, 1
    %p122 = por %p120, %p121
    %p124 = scmp.ne.s32.totalorder %s107, %s123
    %p125 = scmp.eq.s32.totalorder %s15, 0
    %p126 = por %p124, %p125
    %p127 = scmp.le.s32.totalorder 1, %s9
    %p128 = scmp.lt.s32.totalorder %s9, 3
    %p129 = pnand %p127, %p128
    %p130 = pneg %p129
    // Predicated region
    $region9: #{co1_forward.3} parent=5 // pred_check
      _
    $region10: #{co1_forward.3} parent=5 // pred_check_branch
      %132 = sbr.rel (%p129) target = $region12
    $region11: #{co1_forward.3} parent=5 // pred_region
      %s133 = ssub.s32 %s9, 1
      // Predicated region
      $region13: #{co1_forward.3} parent=11 // pred_check
        %p134 = pneg %p70
      $region14: #{co1_forward.3} parent=11 // pred_check_branch
        %136 = sbr.rel (%p134) target = $region16
      $region15: #{co1_forward.3} parent=11 // pred_region
        _
      $region16: #{co1_forward.3} parent=11 // pred_fallthru
        _
      // Predicated region
      $region17: #{co1_forward.3} parent=11 // pred_check
        %p137 = pneg %p91
      $region18: #{co1_forward.3} parent=11 // pred_check_branch
        %139 = sbr.rel (%p137) target = $region20
      $region19: #{co1_forward.3} parent=11 // pred_region
        _
      $region20: #{co1_forward.3} parent=11 // pred_fallthru
        _
    $region12: #{co1_forward.3} parent=5 // pred_fallthru
      _
    %p140 = scmp.lt.s32.totalorder %s9, 2
    // Predicated region
    $region21: #{co1_forward.3} parent=5 // pred_check
      %p141 = pneg %p140
    $region22: #{co1_forward.3} parent=5 // pred_check_branch
      %143 = sbr.rel (%p141) target = $region24
    $region23: #{co1_forward.3} parent=5 // pred_region
      // Predicated region
      $region25: #{co1_forward.3} parent=23 // pred_check
        %p144 = pneg %p43
      $region26: #{co1_forward.3} parent=23 // pred_check_branch
        %146 = sbr.rel (%p144) target = $region28
      $region27: #{co1_forward.3} parent=23 // pred_region
        %s147 = smul.u32 2, %s17
        %p148 = scmp.lt.s32.totalorder %s16, 1
        %s149 = scalar_select %p148, %s16, 1
        %p150 = scmp.lt.s32.totalorder %s147, 1
        %s151 = scalar_select %p150, %s147, 1
        %s152 = smul.addr %s149, 2
        %s153 = sadd.s32 %s151, %s152
        %s154 = smul.addr %s153, 8
        %s155 = scalar_lea.vmem %s0, %s154
        %s156 = smul.u32 2, %s17
      $region28: #{co1_forward.3} parent=23 // pred_fallthru
        _
    $region24: #{co1_forward.3} parent=5 // pred_fallthru
      _
    %p157 = scmp.le.s32.totalorder 1, %s9
    %p158 = scmp.lt.s32.totalorder %s9, 3
    %p159 = pnand %p157, %p158
    %p160 = pneg %p159
    // Predicated region
    $region29: #{co1_forward.3} parent=5 // pred_check
      _
    $region30: #{co1_forward.3} parent=5 // pred_check_branch
      %162 = sbr.rel (%p159) target = $region32
    $region31: #{co1_forward.3} parent=5 // pred_region
      %s163 = ssub.s32 %s9, 1
      %s164 = smul.u32 2, %s19
      %p165 = scmp.lt.s32.totalorder %s18, 1
      %s166 = scalar_select %p165, %s18, 1
      %p167 = scmp.lt.s32.totalorder %s164, 1
      %s168 = scalar_select %p167, %s164, 1
      %s169 = smul.addr %s166, 2
      %s170 = sadd.s32 %s168, %s169
      %s171 = smul.addr %s170, 8
      %s172 = scalar_lea.vmem %s0, %s171
      %p173 = pneg %p49
      %p174 = pneg %p46
      %p175 = pneg %p70
      %p176 = pneg %p67
      %p177 = pneg %p91
      %p178 = pneg %p88
      %p179 = pneg %p119
      %p180 = pneg %p116
      %s181 = smul.u32 2, %s19
      %p182 = scmp.lt.s32.totalorder %s18, 1
      %s183 = scalar_select %p182, %s18, 1
      %p184 = scmp.lt.s32.totalorder %s181, 1
      %s185 = scalar_select %p184, %s181, 1
      %s186 = smul.addr %s183, 2
      %s187 = sadd.s32 %s185, %s186
      %s188 = smul.addr %s187, 8
      %s189 = scalar_lea.vmem %s3, %s188
      %s190 = smul.u32 2, %s19
      %p191 = scmp.lt.s32.totalorder %s18, 1
      %s192 = scalar_select %p191, %s18, 1
      %p193 = scmp.lt.s32.totalorder %s190, 1
      %s194 = scalar_select %p193, %s190, 1
      %s195 = smul.addr %s192, 2
      %s196 = sadd.s32 %s194, %s195
      %s197 = smul.addr %s196, 8
      %s198 = scalar_lea.vmem %s0, %s197
      %s199 = smul.u32 2, %s19
      %s200 = smul.u32 2, %s19
      %p201 = scmp.lt.s32.totalorder %s18, 1
      %s202 = scalar_select %p201, %s18, 1
      %p203 = scmp.lt.s32.totalorder %s200, 1
      %s204 = scalar_select %p203, %s200, 1
      %s205 = smul.addr %s202, 2
      %s206 = sadd.s32 %s204, %s205
      %s207 = smul.addr %s206, 8
      %s208 = scalar_lea.vmem %s3, %s207
      %s209 = smul.u32 2, %s19
      %v210 = vld [vmem:[%s198] sm:$0xff]
      %v211 = vld [vmem:[%s198 + $0x8] sm:$0xff]
      %v212 = vld [vmem:[%s1] sm:$0xff]
      %214 = vset.pattern.permute.xlu0 0
      %215 = vperm.xlu0 %214, %v212
      %v216 = vpop.permute.xlu0 %215
      %v218 = vmul.f32 %v210, %v216
      %v219 = vmul.f32 %v211, %v216
      %v220 = vld [vmem:[%s2] sm:$0xff]
      %222 = vset.pattern.permute.xlu0 0
      %223 = vperm.xlu0 %222, %v220
      %v224 = vpop.permute.xlu0 %223
      %v226 = vadd.f32 %v218, %v224
      %v227 = vadd.f32 %v219, %v224
      %v228 = vmax.f32 %v226, 0.0
      %v229 = vmax.f32 %v227, 0.0
      %230 = vst [vmem:[%s208] sm:$0xff] %v228
      %231 = vst [vmem:[%s208 + $0x8] sm:$0xff] %v229
      %s232 = smul.u32 2, %s19
      %p233 = scmp.lt.s32.totalorder %s18, 1
      %s234 = scalar_select %p233, %s18, 1
      %p235 = scmp.lt.s32.totalorder %s232, 1
      %s236 = scalar_select %p235, %s232, 1
      %s237 = smul.addr %s234, 2
      %s238 = sadd.s32 %s236, %s237
      %s239 = smul.addr %s238, 8
      %s240 = scalar_lea.vmem %s3, %s239
      // Predicated region
      $region33: #{co1_forward.3} parent=31 // pred_check
        %p241 = pneg %p116
      $region34: #{co1_forward.3} parent=31 // pred_check_branch
        %243 = sbr.rel (%p241) target = $region36
      $region35: #{co1_forward.3} parent=31 // pred_region
        %s244 = smul.u32 2, %s19
      $region36: #{co1_forward.3} parent=31 // pred_fallthru
        _
    $region32: #{co1_forward.3} parent=5 // pred_fallthru
      _
    %p245 = scmp.le.s32.totalorder 2, %s9
    // Predicated region
    $region37: #{co1_forward.3} parent=5 // pred_check
      %p246 = pneg %p245
    $region38: #{co1_forward.3} parent=5 // pred_check_branch
      %248 = sbr.rel (%p246) target = $region40
    $region39: #{co1_forward.3} parent=5 // pred_region
      %s249 = ssub.s32 %s9, 2
      // Predicated region
      $region41: #{co1_forward.3} parent=39 // pred_check
        %p250 = pneg %p122
      $region42: #{co1_forward.3} parent=39 // pred_check_branch
        %252 = sbr.rel (%p250) target = $region44
      $region43: #{co1_forward.3} parent=39 // pred_region
        %s253 = smul.u32 2, %s21
        %p254 = scmp.lt.s32.totalorder %s20, 1
        %s255 = scalar_select %p254, %s20, 1
        %p256 = scmp.lt.s32.totalorder %s253, 1
        %s257 = scalar_select %p256, %s253, 1
        %s258 = smul.addr %s255, 2
        %s259 = sadd.s32 %s257, %s258
        %s260 = smul.addr %s259, 8
        %s261 = scalar_lea.vmem %s3, %s260
      $region44: #{co1_forward.3} parent=39 // pred_fallthru
        _
    $region40: #{co1_forward.3} parent=5 // pred_fallthru
      _
  $region6: #{co1_forward.3} parent=0 // loop_footer
    %s13 = sadd.s32 1, %s9
  $region7: #{co1_forward.3} parent=0 // loop_footer_branch
    %8 = sbr.rel target = $region3
  $region8: #{co1_forward.3} parent=0 // loop_exit
    _

</llo_original>
